<compile_context>
chip_gen: v5e
topology: v5e:2x2
jax: 0.10.0
libtpu: 0.0.40
codegen_flags: <defaults>
</compile_context>

<pallas_src>
import functools

import jax
import jax.numpy as jnp
from jax.experimental import pallas as pl
from jax.experimental.pallas import tpu as pltpu


_NEG_INF = -1e30          # masked / out-of-range label columns never win argmax
_VMEM_LIMIT = 48 * 1024 * 1024   # below v7x's 64 MiB physical VMEM per TC
_SUBLANE = 8


def _round_up(x: int, m: int) -> int:
    return (x + m - 1) // m * m


def _choose_tiles(M: int, C: int, H: int, x_itemsize: int, tk_max: int):
    """MXU / DMA friendly tiles.

    Returns (tm, tn, tk, Hp).  tk spans all of H when it fits (single-K fast
    path); otherwise the largest 128-multiple <= tk_max dividing H (avoids
    padding the dominant [M, H] tensor), falling back to tk_max with padding.
    """
    if H <= tk_max:
        tk = H
    else:
        tk = tk_max - tk_max % 128
        for cand in range(tk, 127, -128):
            if H % cand == 0:
                tk = cand
                break
    Hp = _round_up(H, tk)

    # Small label sets: a single full-width tile (no j axis); big ones: 512
    # panels.  For C << H the kernel is HBM-bound, so MXU fill is not chased.
    tn = C if C <= 512 else 512

    # Target >= ~4 MiB of x bytes per grid step (amortizes ~0.35us/step), cap
    # for VMEM, keep >= 2 i-tiles when M allows so v7x's two TCs both work.
    target_bytes = 4 * 1024 * 1024
    tm = max(256, target_bytes // max(1, tk * x_itemsize))
    tm = min(tm, 1024)
    tm -= tm % 128
    if M >= 512:
        tm = min(tm, _round_up((M + 1) // 2, 128))
    tm = min(tm, _round_up(M, _SUBLANE))
    return tm, tn, tk, Hp


# --------------------------------------------------------------------------
# forward: logits = hidden @ W + b
# --------------------------------------------------------------------------

def _head_kernel_1k(x_ref, w_ref, b_ref, o_ref, *, cast_x):
    """Single-K path: whole reduction in one dot, no accumulator scratch."""
    x = x_ref[...]
    if cast_x:
        x = x.astype(w_ref.dtype)
    acc = jnp.dot(x, w_ref[...], preferred_element_type=jnp.float32)
    o_ref[...] = (acc + b_ref[...]).astype(o_ref.dtype)


def _head_kernel_mk(x_ref, w_ref, b_ref, o_ref, acc_ref, *, cast_x):
    """Multi-K path: grid = (i, j, k) with k (reduction) innermost."""
    k = pl.program_id(2)

    @pl.when(k == 0)
    def _():
        acc_ref[...] = jnp.zeros_like(acc_ref)

    x = x_ref[...]
    if cast_x:
        x = x.astype(w_ref.dtype)
    acc_ref[...] += jnp.dot(x, w_ref[...], preferred_element_type=jnp.float32)

    @pl.when(k == pl.num_programs(2) - 1)
    def _():
        o_ref[...] = (acc_ref[...] + b_ref[...]).astype(o_ref.dtype)


def decoder_forward(hidden, weight, bias, *, cast_to_bf16=False, tk_max=2048):
    """Pallas 'forward from hidden states to outputs'.

    hidden: [B, S, H]   weight: [H, C]   bias: [C]   ->   logits: [B, S, C]
    """
    B, S, H = hidden.shape
    C = weight.shape[1]
    M = B * S
    out_dtype = hidden.dtype

    x2d = hidden.reshape(M, H)
    w2d = weight
    b2d = bias.reshape(1, C).astype(jnp.float32)   # bias added in f32
    if cast_to_bf16:
        # Only the small weight is cast in the wrapper; hidden stays in its
        # native dtype (a wrapper astype would be an extra HBM pass over the
        # dominant tensor) and is cast tile-by-tile inside the kernel.
        w2d = w2d.astype(jnp.bfloat16)
    cast_x = x2d.dtype != w2d.dtype

    tm, tn, tk, Hp = _choose_tiles(M, C, H, x2d.dtype.itemsize, tk_max)

    if Hp != H:   # only the K (reduction) axis genuinely needs zero padding
        x2d = jnp.pad(x2d, ((0, 0), (0, Hp - H)))
        w2d = jnp.pad(w2d, ((0, Hp - H), (0, 0)))

    grid_i = pl.cdiv(M, tm)
    grid_j = pl.cdiv(C, tn)
    grid_k = Hp // tk

    cost = pl.CostEstimate(
        flops=2 * M * Hp * C,
        transcendentals=0,
        bytes_accessed=(x2d.size * x2d.dtype.itemsize
                        + w2d.size * w2d.dtype.itemsize
                        + M * C * jnp.dtype(out_dtype).itemsize),
    )

    if grid_k == 1:
        out = pl.pallas_call(
            functools.partial(_head_kernel_1k, cast_x=cast_x),
            out_shape=jax.ShapeDtypeStruct((M, C), out_dtype),
            grid_spec=pltpu.PrefetchScalarGridSpec(
                num_scalar_prefetch=0,
                grid=(grid_i, grid_j),
                in_specs=[
                    pl.BlockSpec((tm, tk), lambda i, j: (i, 0)),
                    pl.BlockSpec((tk, tn), lambda i, j: (0, j)),
                    pl.BlockSpec((1, tn), lambda i, j: (0, j)),
                ],
                out_specs=pl.BlockSpec((tm, tn), lambda i, j: (i, j)),
            ),
            compiler_params=pltpu.CompilerParams(
                dimension_semantics=("parallel", "parallel"),
                vmem_limit_bytes=_VMEM_LIMIT),
            cost_estimate=cost,
        )(x2d, w2d, b2d)
    else:
        out = pl.pallas_call(
            functools.partial(_head_kernel_mk, cast_x=cast_x),
            out_shape=jax.ShapeDtypeStruct((M, C), out_dtype),
            grid_spec=pltpu.PrefetchScalarGridSpec(
                num_scalar_prefetch=0,
                grid=(grid_i, grid_j, grid_k),
                in_specs=[
                    pl.BlockSpec((tm, tk), lambda i, j, k: (i, k)),
                    pl.BlockSpec((tk, tn), lambda i, j, k: (k, j)),
                    pl.BlockSpec((1, tn), lambda i, j, k: (0, j)),
                ],
                out_specs=pl.BlockSpec((tm, tn), lambda i, j, k: (i, j)),
                scratch_shapes=[pltpu.VMEM((tm, tn), jnp.float32)],
            ),
            compiler_params=pltpu.CompilerParams(
                dimension_semantics=("parallel", "parallel", "arbitrary"),
                vmem_limit_bytes=_VMEM_LIMIT),
            cost_estimate=cost,
        )(x2d, w2d, b2d)

    return out.reshape(B, S, C)


# --------------------------------------------------------------------------
# decode: fused argmax — emit only [B, S] indices, skip the logits writeback
# --------------------------------------------------------------------------

def _decode_kernel_1k(x_ref, w_ref, b_ref, idx_ref, max_ref, arg_ref, *,
                      cast_x, tn, num_labels, mask_cols):
    j = pl.program_id(1)
    nj = pl.num_programs(1)

    @pl.when(j == 0)
    def _():
        max_ref[...] = jnp.full_like(max_ref, _NEG_INF)
        arg_ref[...] = jnp.zeros_like(arg_ref)

    x = x_ref[...]
    if cast_x:
        x = x.astype(w_ref.dtype)
    logits = jnp.dot(x, w_ref[...], preferred_element_type=jnp.float32) + b_ref[...]
    col_ids = jax.lax.broadcasted_iota(jnp.int32, logits.shape, 1) + j * tn
    if mask_cols:   # neutralize out-of-range label columns of the edge tile
        logits = jnp.where(col_ids < num_labels, logits, _NEG_INF)

    tile_max = jnp.max(logits, axis=-1, keepdims=True)            # (tm, 1)
    tile_arg = jnp.min(
        jnp.where(logits == tile_max, col_ids, jnp.int32(2 ** 30)),
        axis=-1, keepdims=True)                                    # first max
    better = tile_max > max_ref[...]                               # strict >
    arg_ref[...] = jnp.where(better, tile_arg, arg_ref[...])
    max_ref[...] = jnp.maximum(max_ref[...], tile_max)

    @pl.when(j == nj - 1)
    def _():
        idx_ref[...] = arg_ref[...]


def _decode_kernel_mk(x_ref, w_ref, b_ref, idx_ref, acc_ref, max_ref, arg_ref, *,
                      cast_x, tn, num_labels, mask_cols):
    # Gating relies on the sequential row-major grid order with k innermost.
    j = pl.program_id(1)
    k = pl.program_id(2)
    nj = pl.num_programs(1)
    nk = pl.num_programs(2)

    @pl.when(jnp.logical_and(j == 0, k == 0))
    def _():
        max_ref[...] = jnp.full_like(max_ref, _NEG_INF)
        arg_ref[...] = jnp.zeros_like(arg_ref)

    @pl.when(k == 0)
    def _():
        acc_ref[...] = jnp.zeros_like(acc_ref)

    x = x_ref[...]
    if cast_x:
        x = x.astype(w_ref.dtype)
    acc_ref[...] += jnp.dot(x, w_ref[...], preferred_element_type=jnp.float32)

    @pl.when(k == nk - 1)
    def _():
        logits = acc_ref[...] + b_ref[...]
        col_ids = jax.lax.broadcasted_iota(jnp.int32, logits.shape, 1) + j * tn
        if mask_cols:
            logits = jnp.where(col_ids < num_labels, logits, _NEG_INF)
        tile_max = jnp.max(logits, axis=-1, keepdims=True)
        tile_arg = jnp.min(
            jnp.where(logits == tile_max, col_ids, jnp.int32(2 ** 30)),
            axis=-1, keepdims=True)
        better = tile_max > max_ref[...]
        arg_ref[...] = jnp.where(better, tile_arg, arg_ref[...])
        max_ref[...] = jnp.maximum(max_ref[...], tile_max)

    @pl.when(jnp.logical_and(j == nj - 1, k == nk - 1))
    def _():
        idx_ref[...] = arg_ref[...]


def decode(hidden, weight, bias, *, cast_to_bf16=False, tk_max=2048):
    """`decode`: argmax over the decoded logits, fused into the matmul kernel."""
    B, S, H = hidden.shape
    C = weight.shape[1]
    M = B * S

    x2d = hidden.reshape(M, H)
    w2d = weight
    b2d = bias.reshape(1, C).astype(jnp.float32)
    if cast_to_bf16:
        w2d = w2d.astype(jnp.bfloat16)
    cast_x = x2d.dtype != w2d.dtype

    tm, tn, tk, Hp = _choose_tiles(M, C, H, x2d.dtype.itemsize, tk_max)

    if Hp != H:
        x2d = jnp.pad(x2d, ((0, 0), (0, Hp - H)))
        w2d = jnp.pad(w2d, ((0, Hp - H), (0, 0)))

    grid_i = pl.cdiv(M, tm)
    grid_j = pl.cdiv(C, tn)
    grid_k = Hp // tk
    mask_cols = (C % tn) != 0

    if grid_k == 1:
        idx = pl.pallas_call(
            functools.partial(_decode_kernel_1k, cast_x=cast_x, tn=tn,
                              num_labels=C, mask_cols=mask_cols),
            out_shape=jax.ShapeDtypeStruct((M, 1), jnp.int32),
            grid_spec=pltpu.PrefetchScalarGridSpec(
                num_scalar_prefetch=0,
                grid=(grid_i, grid_j),
                in_specs=[
                    pl.BlockSpec((tm, tk), lambda i, j: (i, 0)),
                    pl.BlockSpec((tk, tn), lambda i, j: (0, j)),
                    pl.BlockSpec((1, tn), lambda i, j: (0, j)),
                ],
                out_specs=pl.BlockSpec((tm, 1), lambda i, j: (i, 0)),
                scratch_shapes=[
                    pltpu.VMEM((tm, 1), jnp.float32),   # running row max
                    pltpu.VMEM((tm, 1), jnp.int32),     # running row argmax
                ],
            ),
            compiler_params=pltpu.CompilerParams(
                # j carries running-max state across iterations -> arbitrary.
                dimension_semantics=("parallel", "arbitrary"),
                vmem_limit_bytes=_VMEM_LIMIT),
        )(x2d, w2d, b2d)
    else:
        idx = pl.pallas_call(
            functools.partial(_decode_kernel_mk, cast_x=cast_x, tn=tn,
                              num_labels=C, mask_cols=mask_cols),
            out_shape=jax.ShapeDtypeStruct((M, 1), jnp.int32),
            grid_spec=pltpu.PrefetchScalarGridSpec(
                num_scalar_prefetch=0,
                grid=(grid_i, grid_j, grid_k),
                in_specs=[
                    pl.BlockSpec((tm, tk), lambda i, j, k: (i, k)),
                    pl.BlockSpec((tk, tn), lambda i, j, k: (k, j)),
                    pl.BlockSpec((1, tn), lambda i, j, k: (0, j)),
                ],
                out_specs=pl.BlockSpec((tm, 1), lambda i, j, k: (i, 0)),
                scratch_shapes=[
                    pltpu.VMEM((tm, tn), jnp.float32),  # matmul accumulator
                    pltpu.VMEM((tm, 1), jnp.float32),   # running row max
                    pltpu.VMEM((tm, 1), jnp.int32),     # running row argmax
                ],
            ),
            compiler_params=pltpu.CompilerParams(
                dimension_semantics=("parallel", "arbitrary", "arbitrary"),
                vmem_limit_bytes=_VMEM_LIMIT),
        )(x2d, w2d, b2d)

    return idx[:, 0].reshape(B, S)


def loosely_decode(hidden, weight, bias, **kw):
    # Base-class semantics: identical to `decode`.
    return decode(hidden, weight, bias, **kw)


def unsqueezed_decode(hidden, weight, bias, num_metrics=1, **kw):
    # Base-class semantics: wrap single-metric decode result in a 1-tuple.
    if num_metrics == 0:
        raise RuntimeError("`_unsqueezed` method does not apply if `num_metrics` is 0")
    elif num_metrics == 1:
        return (decode(hidden, weight, bias, **kw),)
    else:
        return decode(hidden, weight, bias, **kw)


if __name__ == "__main__":
    key = jax.random.PRNGKey(0)
    k_h, k_w, k_b, k_h2, k_w2 = jax.random.split(key, 5)

    # --- single-K fast path (tk = H, 2-D grid, no accumulator) ---
    B, S, H, C = 2, 8, 32, 16
    hidden = jax.random.normal(k_h, (B, S, H), dtype=jnp.float32)
    weight = jax.random.normal(k_w, (H, C), dtype=jnp.float32) * 0.1
    bias = jax.random.normal(k_b, (C,), dtype=jnp.float32) * 0.1
    ref = jnp.einsum("bsh,hc->bsc", hidden, weight) + bias

    logits = decoder_forward(hidden, weight, bias)
    jax.block_until_ready(logits)
    assert logits.shape == (B, S, C)
    assert jnp.allclose(logits, ref, atol=1e-4, rtol=1e-4)

    # bf16 MXU operands (weight cast in wrapper, x tile cast in-kernel).
    logits_bf16 = decoder_forward(hidden, weight, bias, cast_to_bf16=True)
    jax.block_until_ready(logits_bf16)
    assert jnp.allclose(logits_bf16, ref, atol=5e-2, rtol=5e-2)

    preds = decode(hidden, weight, bias)
    jax.block_until_ready(preds)
    assert preds.shape == (B, S)
    assert jnp.array_equal(preds, jnp.argmax(ref, axis=-1))

    preds_t = unsqueezed_decode(hidden, weight, bias, num_metrics=1)
    jax.block_until_ready(preds_t)
    assert isinstance(preds_t, tuple) and preds_t[0].shape == (B, S)

    # --- multi-K (accumulator) path, forced with a small tk_max ---
    H2 = 256
    hidden2 = jax.random.normal(k_h2, (B, S, H2), dtype=jnp.float32)
    weight2 = jax.random.normal(k_w2, (H2, C), dtype=jnp.float32) * 0.1
    ref2 = jnp.einsum("bsh,hc->bsc", hidden2, weight2) + bias

    logits2 = decoder_forward(hidden2, weight2, bias, tk_max=128)
    jax.block_until_ready(logits2)
    assert jnp.allclose(logits2, ref2, atol=1e-3, rtol=1e-3)

    preds2 = decode(hidden2, weight2, bias, tk_max=128)
    jax.block_until_ready(preds2)
    assert jnp.array_equal(preds2, jnp.argmax(ref2, axis=-1))

    print("KERNEL_OK")
</pallas_src>

<mosaic_0001>
module attributes {stable_mosaic.version = 11 : i64} {
  func.func @_head_kernel_1k(%arg0: i32, %arg1: i32, %arg2: memref<16x32xf32, #tpu.memory_space<vmem>>, %arg3: memref<32x16xf32, #tpu.memory_space<vmem>>, %arg4: memref<1x16xf32, #tpu.memory_space<vmem>>, %arg5: memref<16x16xf32, #tpu.memory_space<vmem>>) attributes {dimension_semantics = [#tpu.dimension_semantics<parallel>, #tpu.dimension_semantics<parallel>], iteration_bounds = array<i64: 1, 1>, scalar_prefetch = 0 : i64, scratch_operands = 0 : i64, tpu.core_type = #tpu.core_type<tc>, window_params = [{transform_indices = @transform_0, window_bounds = array<i64: 16, 32>}, {transform_indices = @transform_1, window_bounds = array<i64: 32, 16>}, {transform_indices = @transform_2, window_bounds = array<i64: 1, 16>}, {transform_indices = @transform_3, window_bounds = array<i64: 16, 16>}]} {
    %c0 = arith.constant 0 : index
    %c0_0 = arith.constant 0 : index
    %0 = vector.load %arg2[%c0, %c0_0] : memref<16x32xf32, #tpu.memory_space<vmem>>, vector<16x32xf32>
    %c0_1 = arith.constant 0 : index
    %c0_2 = arith.constant 0 : index
    %1 = vector.load %arg3[%c0_1, %c0_2] : memref<32x16xf32, #tpu.memory_space<vmem>>, vector<32x16xf32>
    %cst = arith.constant dense<0.000000e+00> : vector<16x16xf32>
    %2 = tpu.matmul %0, %1, %cst {dimension_numbers = #tpu.dot_dimension_numbers<[1], [0], [0], [1], [0, 0, 1, 1], [], []>} : vector<16x32xf32>, vector<32x16xf32>, vector<16x16xf32> -> vector<16x16xf32>
    %c0_3 = arith.constant 0 : index
    %c0_4 = arith.constant 0 : index
    %3 = vector.load %arg4[%c0_3, %c0_4] : memref<1x16xf32, #tpu.memory_space<vmem>>, vector<1x16xf32>
    %4 = vector.broadcast %3 : vector<1x16xf32> to vector<16x16xf32>
    %5 = arith.addf %2, %4 : vector<16x16xf32>
    %c0_5 = arith.constant 0 : index
    %c0_6 = arith.constant 0 : index
    %6 = vector.load %arg5[%c0_5, %c0_6] : memref<16x16xf32, #tpu.memory_space<vmem>>, vector<16x16xf32>
    tpu.vector_store %arg5[%c0_5, %c0_6], %5 {strides = array<i32>} : memref<16x16xf32, #tpu.memory_space<vmem>>, vector<16x16xf32>,
    return
  }
  func.func @transform_0(%arg0: i32, %arg1: i32) -> (i32, i32) {
    %c0_i32 = arith.constant 0 : i32
    %c0_i32_0 = arith.constant 0 : i32
    return %arg0, %c0_i32 : i32, i32
  }
  func.func @transform_1(%arg0: i32, %arg1: i32) -> (i32, i32) {
    %c0_i32 = arith.constant 0 : i32
    %c0_i32_0 = arith.constant 0 : i32
    return %c0_i32, %arg1 : i32, i32
  }
  func.func @transform_2(%arg0: i32, %arg1: i32) -> (i32, i32) {
    %c0_i32 = arith.constant 0 : i32
    %c0_i32_0 = arith.constant 0 : i32
    return %c0_i32, %arg1 : i32, i32
  }
  func.func @transform_3(%arg0: i32, %arg1: i32) -> (i32, i32) {
    %c0_i32 = arith.constant 0 : i32
    return %arg0, %arg1 : i32, i32
  }
}

</mosaic_0001>

<llo_original>
// kernel: tpu_custom_call.1
$region0: #{tpu_custom_call.1}
  #allocation0 [shape = 'u32[]', space=smem, size = 0x4, offset = 0x4, fixed_abs, tag = 'smem constant byte address 0x4 - core index']
  #allocation1 [shape = 'u32[72,128]{1,0:T(1,128)}', space=vmem, size = 0x9000, scoped, tag = 'internal scratch']
  %s0 = inlined_call_operand.vmem [shape: f32[16,32], index: 0, kind: input, shape index: {}]
  %s1 = inlined_call_operand.vmem [shape: f32[32,16], index: 1, kind: input, shape index: {}]
  %s2 = inlined_call_operand.vmem [shape: f32[1,16], index: 2, kind: input, shape index: {}]
  %s3 = inlined_call_operand.hbm [shape: f32[16,16], index: 3, kind: output, shape index: {}]
  %s4 = sld [smem:[#allocation0]]
  $region22: #{tpu_custom_call.1} parent=0
    _
  %s6 = ssub.s32 1, %s4
  %s7 = scalar_select 0, %s6, %s4
  $region1: #{tpu_custom_call.1} parent=0
    #allocation2 [shape = 'u8[8192]{0}', space=vmem, size = 0x2000, scoped, tag = 'output window, operand 0, single buffered']
    #allocation3 [shape = 's32[1]{0}', space=sflag, size = 0x4, scoped, tag = 'scoped memory for tpu_custom_call.1']
    %8 = vsyncpa [#allocation3], 0
    // Predicated region
    $region2: #{tpu_custom_call.1} parent=1 // pred_check
      _
    $region3: #{tpu_custom_call.1} parent=1 // pred_check_branch
      %10 = sbr.rel (0) target = $region5
    $region4: #{tpu_custom_call.1} parent=1 // pred_region
      _
    $region5: #{tpu_custom_call.1} parent=1 // pred_fallthru
      _
    // Predicated region
    $region6: #{tpu_custom_call.1} parent=1 // pred_check
      _
    $region7: #{tpu_custom_call.1} parent=1 // pred_check_branch
      %12 = sbr.rel (0) target = $region9
    $region8: #{tpu_custom_call.1} parent=1 // pred_region
      _
    $region9: #{tpu_custom_call.1} parent=1 // pred_fallthru
      _
    // Predicated region
    $region10: #{tpu_custom_call.1} parent=1 // pred_check
      _
    $region11: #{tpu_custom_call.1} parent=1 // pred_check_branch
      %14 = sbr.rel (0) target = $region13
    $region12: #{tpu_custom_call.1} parent=1 // pred_region
      _
    $region13: #{tpu_custom_call.1} parent=1 // pred_fallthru
      _
    %v15 = vld [vmem:[%s0] sm:$0xff]
    %v16 = vld [vmem:[%s0 + $0x8] sm:$0xff]
    %v17 = vld [vmem:[%s1] sm:$0xff]
    %v18 = vld [vmem:[%s1 + $0x8] sm:$0xff]
    %v19 = vld [vmem:[%s1 + $0x10] sm:$0xff]
    %v20 = vld [vmem:[%s1 + $0x18] sm:$0xff]
    %v21 = vld [vmem:[%s2] sm:$0x1]
    %v23 = vperm.slane %v21, 0
    %vm25 = vcmask 261120
    %v27 = vsel %vm25, %v15, 0
    %v30 = vsel %vm25, %v16, 0
    %32 = vmatpush.msra.mxu0 0.0
    %33 = vmatpush.msra.mxu0 0.0
    %34 = vmatpush.msra.mxu0 0.0
    %35 = vmatpush.msra.mxu0 0.0
    %36 = vmatpush.msra.mxu0 0.0
    %37 = vmatpush.msra.mxu0 0.0
    %38 = vmatpush.msra.mxu0 0.0
    %39 = vmatpush.msra.mxu0 0.0
    %40 = vmatpush.msra.mxu0 0.0
    %41 = vmatpush.msra.mxu0 0.0
    %42 = vmatpush.msra.mxu0 0.0
    %43 = vmatpush.msra.mxu0 0.0
    %44 = vmatpush.msra.mxu0 %v20
    %45 = vmatpush.msra.mxu0 %v19
    %46 = vmatpush.msra.mxu0 %v18
    %47 = vmatpush.msra.mxu0 %v17
    %48 = vmatmul.f32.gmra.mxu0 %v27
    %v49 = vpop.f32.mrf.mxu0
    %v50 = vadd.f32 %v23, %v49
    %51 = vmatmul.f32.gmra.mxu0 %v30
    %v52 = vpop.f32.mrf.mxu0
    %v53 = vadd.f32 %v23, %v52
    %54 = vdwg.mxu0
    %vm55 = vcmask 130048
    %56 = vst.msk [vmem:[#allocation2] sm:$0xff] %vm55, %v50
    %57 = vst.msk [vmem:[#allocation2 + $0x8] sm:$0xff] %vm55, %v53
    // Predicated region
    $region14: #{tpu_custom_call.1} parent=1 // pred_check
      _
    $region15: #{tpu_custom_call.1} parent=1 // pred_check_branch
      %59 = sbr.rel (0) target = $region17
    $region16: #{tpu_custom_call.1} parent=1 // pred_region
      %61 = vsyncadd [#allocation3], 0
      %s62 = sshll.u32 [#allocation2], 4
      %s63 = int_to_ptr.vmem [resolvable:$true] %s62
      %s64 = sshll.u32 %s3, 4
      %s65 = int_to_ptr.hbm [resolvable:$true] %s64
      %70 = dma.vmem_to_hbm [thread:$0]  %s63, 256, %s65, [#allocation3], 128, 128, 8
    $region17: #{tpu_custom_call.1} parent=1 // pred_fallthru
      _
    // Predicated region
    $region18: #{tpu_custom_call.1} parent=1 // pred_check
      _
    $region19: #{tpu_custom_call.1} parent=1 // pred_check_branch
      %72 = sbr.rel (0) target = $region21
    $region20: #{tpu_custom_call.1} parent=1 // pred_region
      %74 = dma.done [#allocation3], 256
    $region21: #{tpu_custom_call.1} parent=1 // pred_fallthru
      _
    %75 = vsyncpa [#allocation3], 1

</llo_original>
